<compile_context>
chip_gen: v7x
topology: tpu7x:2x2x1
jax: 0.10.0
libtpu: 0.0.40
codegen_flags: <defaults>
</compile_context>

<pallas_src>
import functools

import jax
import jax.numpy as jnp
import numpy as np
from jax.experimental import pallas as pl
from jax.experimental.pallas import tpu as pltpu


# ----------------------------------------------------------------------------
# Pallas kernel: per-row (channel) scale/shift, lanes = output spatial.
# ----------------------------------------------------------------------------
def _scale_shift_kernel(x_ref, tb_ref, o_ref):
    # x_ref  : (Rt, Ct)  rows = (n, c) pairs, lanes = flattened output spatial
    # tb_ref : (Rt, 2)   per-row [scale, shift] in f32 (constant across lane axis)
    # o_ref  : (Rt, Ct)
    # f32 math matches the reference BN fusion; for f32 inputs the astype is a
    # no-op, and the kernel is HBM-bound either way (VPU slot never binds).
    x = x_ref[...].astype(jnp.float32)
    t = tb_ref[:, 0:1]
    b = tb_ref[:, 1:2]
    o_ref[...] = (x * t + b).astype(o_ref.dtype)


def _scale_shift_pallas(x4d, t, b):
    """y[n, c, h, w] = x4d[n, c, h, w] * t[c] + b[c]  (lane-dense, tiled)."""
    N, C, Ho, Wo = x4d.shape
    R = N * C
    P = Ho * Wo

    x2d = x4d.reshape(R, P)                                  # free (row-major) reshape
    tb = jnp.stack([jnp.tile(t, N), jnp.tile(b, N)], axis=-1).astype(jnp.float32)  # (R, 2)

    # ---------------- tile / grid selection ----------------
    Rt = R if R <= 256 else 256            # 256 % 8 == 0
    Ct = P if P <= 2048 else 2048          # 2048 % 128 == 0
    # v7x megacore: ensure >= 2 steps along a "parallel" axis when splittable.
    if pl.cdiv(R, Rt) * pl.cdiv(P, Ct) < 2:
        if R >= 16:
            Rt = max(8, (((R + 1) // 2 + 7) // 8) * 8)           # multiple of 8
        elif P >= 256:
            Ct = max(128, (((P + 1) // 2 + 127) // 128) * 128)   # multiple of 128
    grid = (pl.cdiv(R, Rt), pl.cdiv(P, Ct))

    out_dtype = x4d.dtype
    bytes_accessed = (x2d.size * x2d.dtype.itemsize
                      + R * P * np.dtype(out_dtype).itemsize
                      + tb.size * tb.dtype.itemsize)
    cost = pl.CostEstimate(flops=2 * R * P, transcendentals=0,
                           bytes_accessed=int(bytes_accessed))

    out2d = pl.pallas_call(
        _scale_shift_kernel,
        out_shape=jax.ShapeDtypeStruct((R, P), out_dtype),
        grid_spec=pl.GridSpec(
            grid=grid,
            in_specs=[
                pl.BlockSpec((Rt, Ct), lambda i, j: (i, j)),
                # lane axis (j) is the innermost grid axis, so this block index
                # stays constant while j sweeps -> tb is not re-DMA'd per step.
                pl.BlockSpec((Rt, 2), lambda i, j: (i, 0)),
            ],
            out_specs=pl.BlockSpec((Rt, Ct), lambda i, j: (i, j)),
        ),
        compiler_params=pltpu.CompilerParams(
            dimension_semantics=("parallel", "parallel"),
            # Double-buffered blocks are <= ~9 MiB; 32 MiB leaves >3x headroom
            # and is below every generation's physical VMEM (incl. v7x 64 MiB).
            vmem_limit_bytes=32 * 1024 * 1024,
            # Let XLA fuse the strided center-tap slice / reshape producer into
            # the x operand instead of materializing it in HBM.
            allow_input_fusion=[True, False],
        ),
        cost_estimate=cost,
    )(x2d, tb)

    return out2d.reshape(N, C, Ho, Wo)


# ----------------------------------------------------------------------------
# Wrapper: BaseRepBranch deploy-time forward.
# ----------------------------------------------------------------------------
def base_rep_branch_forward(
    x_nchw,
    gamma,
    beta,
    running_mean,
    running_var,
    *,
    in_channels,
    out_channels,
    kernel_size=3,
    stride=2,
    padding=1,
    groups=1,
    dilation=1,
    eps=1e-5,
    ignore=False,
):
    N, Cin, H, W = x_nchw.shape
    K = kernel_size
    Cout = out_channels
    assert Cin == in_channels
    assert gamma.shape[0] == Cout  # num_features must match conv output channels

    # id_tensor() reduces to a per-channel identity in these cases:
    if groups == 1:
        assert out_channels >= in_channels
    else:
        # grouped identity is a plain per-channel identity iff Cout == Cin
        # TODO(synk): groups > 1 with out_channels != in_channels is not supported.
        assert out_channels == in_channels and in_channels % groups == 0

    Ho = (H + 2 * padding - dilation * (K - 1) - 1) // stride + 1
    Wo = (W + 2 * padding - dilation * (K - 1) - 1) // stride + 1

    if ignore:  # fuse() -> (0, 0): branch contributes nothing
        return jnp.zeros((N, Cout, Ho, Wo), x_nchw.dtype)

    # -------- BN fusion hoisted out of the kernel (computed once, f32) --------
    t = gamma.astype(jnp.float32) * jax.lax.rsqrt(running_var.astype(jnp.float32) + eps)
    b = beta.astype(jnp.float32) - running_mean.astype(jnp.float32) * t   # (Cout,)

    # -------- strided center-tap view of x (identity-kernel sparsity) --------
    off = dilation * (K // 2) - padding
    h_last = off + (Ho - 1) * stride
    w_last = off + (Wo - 1) * stride
    if off < 0 or h_last > H - 1 or w_last > W - 1:
        # center tap can land in the zero-padding halo -> pad explicitly
        x_use = jnp.pad(x_nchw, ((0, 0), (0, 0), (padding, padding), (padding, padding)))
        off_h = off_w = dilation * (K // 2)
    else:
        x_use = x_nchw
        off_h = off_w = off

    x_strided = jax.lax.slice(
        x_use,
        (0, 0, off_h, off_w),
        (N, Cin, off_h + (Ho - 1) * stride + 1, off_w + (Wo - 1) * stride + 1),
        (1, 1, stride, stride),
    )  # (N, Cin, Ho, Wo)  -- candidate for input fusion into the pallas call

    # -------- per-channel scale/shift on the real (Cin) channels --------
    y_main = _scale_shift_pallas(x_strided, t[:Cin], b[:Cin])   # (N, Cin, Ho, Wo)

    if Cout > Cin:
        # Extra output channels (groups == 1) have an all-zero fused kernel:
        # they receive only the BN bias.  No jnp.pad of the kernel input
        # anymore (it added an output-sized HBM write + re-read).
        # TODO(synk): this cold path still pays one output copy via concat; a
        # fully fused single-call path would need per-block row clamping in
        # the index_map.
        extra = jnp.broadcast_to(
            b[Cin:].astype(x_nchw.dtype).reshape(1, Cout - Cin, 1, 1),
            (N, Cout - Cin, Ho, Wo),
        )
        return jnp.concatenate([y_main, extra], axis=1)
    return y_main


# ----------------------------------------------------------------------------
# Pure-JAX reference (fuse_kernel_bn + lax conv) for correctness checking.
# ----------------------------------------------------------------------------
def make_id_tensor(in_channels, out_channels, groups, kernel_size):
    """PyTorch id_tensor(): OIHW identity kernel (self.conv is None)."""
    input_dim = in_channels // groups
    w = np.zeros((out_channels, input_dim, kernel_size, kernel_size), dtype=np.float32)
    for idx in range(in_channels):
        w[idx, idx % input_dim, kernel_size // 2, kernel_size // 2] = 1.0
    return jnp.asarray(w)


def reference_forward(x_nchw, gamma, beta, running_mean, running_var, *,
                      in_channels, out_channels, kernel_size, stride, padding,
                      groups, dilation, eps):
    w_id = make_id_tensor(in_channels, out_channels, groups, kernel_size)  # OIHW
    std = jnp.sqrt(running_var + eps)
    t = (gamma / std).reshape(-1, 1, 1, 1)
    w_fused = w_id * t
    b_fused = beta - running_mean * gamma / std
    y = jax.lax.conv_general_dilated(
        x_nchw, w_fused,
        window_strides=(stride, stride),
        padding=[(padding, padding), (padding, padding)],
        rhs_dilation=(dilation, dilation),
        dimension_numbers=("NCHW", "OIHW", "NCHW"),
        feature_group_count=groups,
    )
    return y + b_fused.reshape(1, -1, 1, 1)


if __name__ == "__main__":
    eps = 1e-5
    key = jax.random.PRNGKey(0)

    # ---- config A: module defaults (in = out = features = 4, k=3, s=2, p=1) ----
    N, C, H, W = 2, 4, 16, 16
    kx, kg, kb, km, kv = jax.random.split(key, 5)
    x = jax.random.normal(kx, (N, C, H, W), dtype=jnp.float32)
    gamma = jax.random.uniform(kg, (C,), minval=0.5, maxval=1.5, dtype=jnp.float32)
    beta = 0.1 * jax.random.normal(kb, (C,), dtype=jnp.float32)
    running_mean = 0.1 * jax.random.normal(km, (C,), dtype=jnp.float32)
    running_var = jax.random.uniform(kv, (C,), minval=0.5, maxval=1.5, dtype=jnp.float32)

    fwd = jax.jit(functools.partial(
        base_rep_branch_forward,
        in_channels=C, out_channels=C, kernel_size=3, stride=2, padding=1,
        groups=1, dilation=1, eps=eps,
    ))
    y = jax.block_until_ready(fwd(x, gamma, beta, running_mean, running_var))

    y_ref = reference_forward(
        x, gamma, beta, running_mean, running_var,
        in_channels=C, out_channels=C, kernel_size=3, stride=2, padding=1,
        groups=1, dilation=1, eps=eps,
    )
    assert y.shape == (N, C, 8, 8), y.shape
    assert jnp.allclose(y, y_ref, atol=1e-4, rtol=1e-4), float(jnp.max(jnp.abs(y - y_ref)))

    # ---- config B: Cout > Cin (bias-only extra channels, no input pad) ----
    Cout_b = 8
    kg2, kb2, km2, kv2 = jax.random.split(jax.random.PRNGKey(1), 4)
    gamma_b = jax.random.uniform(kg2, (Cout_b,), minval=0.5, maxval=1.5, dtype=jnp.float32)
    beta_b = 0.1 * jax.random.normal(kb2, (Cout_b,), dtype=jnp.float32)
    mean_b = 0.1 * jax.random.normal(km2, (Cout_b,), dtype=jnp.float32)
    var_b = jax.random.uniform(kv2, (Cout_b,), minval=0.5, maxval=1.5, dtype=jnp.float32)

    fwd_b = jax.jit(functools.partial(
        base_rep_branch_forward,
        in_channels=C, out_channels=Cout_b, kernel_size=3, stride=2, padding=1,
        groups=1, dilation=1, eps=eps,
    ))
    y_b = jax.block_until_ready(fwd_b(x, gamma_b, beta_b, mean_b, var_b))
    y_b_ref = reference_forward(
        x, gamma_b, beta_b, mean_b, var_b,
        in_channels=C, out_channels=Cout_b, kernel_size=3, stride=2, padding=1,
        groups=1, dilation=1, eps=eps,
    )
    assert y_b.shape == (N, Cout_b, 8, 8), y_b.shape
    assert jnp.allclose(y_b, y_b_ref, atol=1e-4, rtol=1e-4), float(jnp.max(jnp.abs(y_b - y_b_ref)))

    # ---- ignore=True path (fuse() -> (0, 0)) ----
    y0 = base_rep_branch_forward(
        x, gamma, beta, running_mean, running_var,
        in_channels=C, out_channels=C, kernel_size=3, stride=2, padding=1,
        groups=1, dilation=1, eps=eps, ignore=True,
    )
    assert jnp.all(y0 == 0) and y0.shape == (N, C, 8, 8)

    print("KERNEL_OK")
</pallas_src>

<mosaic_0001>
module attributes {stable_mosaic.version = 11 : i64} {
  func.func @_scale_shift_kernel(%arg0: i32, %arg1: i32, %arg2: memref<8x64xf32, #tpu.memory_space<vmem>>, %arg3: memref<8x2xf32, #tpu.memory_space<vmem>>, %arg4: memref<8x64xf32, #tpu.memory_space<vmem>>) attributes {dimension_semantics = [#tpu.dimension_semantics<parallel>, #tpu.dimension_semantics<parallel>], iteration_bounds = array<i64: 1, 1>, scalar_prefetch = 0 : i64, scratch_operands = 0 : i64, tpu.core_type = #tpu.core_type<tc>, window_params = [{transform_indices = @transform_0, window_bounds = array<i64: 8, 64>}, {transform_indices = @transform_1, window_bounds = array<i64: 8, 2>}, {transform_indices = @transform_2, window_bounds = array<i64: 8, 64>}]} {
    %c0 = arith.constant 0 : index
    %c0_0 = arith.constant 0 : index
    %0 = vector.load %arg2[%c0, %c0_0] : memref<8x64xf32, #tpu.memory_space<vmem>>, vector<8x64xf32>
    %c0_1 = arith.constant 0 : index
    %c0_2 = arith.constant 0 : index
    %1 = vector.load %arg3[%c0_1, %c0_2] : memref<8x2xf32, #tpu.memory_space<vmem>>, vector<8x1xf32>
    %c0_3 = arith.constant 0 : index
    %c1 = arith.constant 1 : index
    %2 = vector.load %arg3[%c0_3, %c1] : memref<8x2xf32, #tpu.memory_space<vmem>>, vector<8x1xf32>
    %3 = vector.broadcast %1 : vector<8x1xf32> to vector<8x64xf32>
    %4 = arith.mulf %0, %3 : vector<8x64xf32>
    %5 = vector.broadcast %2 : vector<8x1xf32> to vector<8x64xf32>
    %6 = arith.addf %4, %5 : vector<8x64xf32>
    %c0_4 = arith.constant 0 : index
    %c0_5 = arith.constant 0 : index
    %7 = vector.load %arg4[%c0_4, %c0_5] : memref<8x64xf32, #tpu.memory_space<vmem>>, vector<8x64xf32>
    tpu.vector_store %arg4[%c0_4, %c0_5], %6 {strides = array<i32>} : memref<8x64xf32, #tpu.memory_space<vmem>>, vector<8x64xf32>,
    return
  }
  func.func @transform_0(%arg0: i32, %arg1: i32) -> (i32, i32) {
    %c0_i32 = arith.constant 0 : i32
    return %arg0, %arg1 : i32, i32
  }
  func.func @transform_1(%arg0: i32, %arg1: i32) -> (i32, i32) {
    %c0_i32 = arith.constant 0 : i32
    %c0_i32_0 = arith.constant 0 : i32
    return %arg0, %c0_i32 : i32, i32
  }
  func.func @transform_2(%arg0: i32, %arg1: i32) -> (i32, i32) {
    %c0_i32 = arith.constant 0 : i32
    return %arg0, %arg1 : i32, i32
  }
}

</mosaic_0001>

<llo_original>
// kernel: tile.17
$region0: #{tile.17}
  #allocation0 [shape = 's32[1]{0}', space=sflag, size = 0x4, scoped, tag = 'scoped memory for tile.17']
  %s0 = inlined_call_operand.vmem [shape: f32[4], index: 0, kind: input, shape index: {}]
  %s1 = inlined_call_operand.vmem [shape: f32[2,4], index: 1, kind: output, shape index: {}]
  // Predicated region
  $region2: #{tile.17} parent=0 // pred_check
    _
  $region3: #{tile.17} parent=0 // pred_check_branch
    %3 = sbr.rel (0) target = $region5
  $region4: #{tile.17} parent=0 // pred_region
    _
  $region5: #{tile.17} parent=0 // pred_fallthru
    _
  %v4 = vld [vmem:[%s0] ss:$0 sm:$0xff]
  %5 = vst [vmem:[%s1] sm:$0x3] %v4

// kernel: tile.19
$region0: #{tile.19}
  %s0 = inlined_call_operand.vmem [shape: f32[2,4], index: 0, kind: input, shape index: {}]
  %s1 = inlined_call_operand.vmem [shape: f32[8,1], index: 1, kind: output, shape index: {}]
  $region1: #{tile.19} parent=0
    #allocation0 [shape = 'u8[4096]{0}', space=vmem, size = 0x1000, scoped, tag = 'scoped mem for output reshape']
    #allocation1 [shape = 'u8[4096]{0}', space=vmem, size = 0x1000, scoped, tag = 'scoped mem for input reshape']
    %s3 = sshllo.u32 0, 2
    %v4 = vld [vmem:[%s0] sm:%s3]
    %5 = vst [vmem:[#allocation1] sm:%s3] %v4
    %v6 = vld [vmem:[#allocation1] sm:$0x1]
    %vm7 = vcmask 31744
    %8 = vst.msk [vmem:[#allocation0] sm:$0x1] %vm7, %v6
    %s9 = scalar_lea.vmem [#allocation1], 1
    %v10 = vld [vmem:[%s9] sm:$0x1]
    %11 = vrot.lane.b32.xlu0 %v10, 4
    %v12 = vpop.permute.xlu0 %11
    %vm13 = vcmask 64544
    %14 = vst.msk [vmem:[#allocation0] sm:$0x1] %vm13, %v12
    %s16 = sshllo.u32 0, 1
    %v18 = vld [vmem:[#allocation0] sm:%s16]
    %s19 = sshllo.u32 0, 1
    %20 = vst [vmem:[%s1] sm:%s19] %v18

// kernel: base_rep_branch_forward.1
$region0: #{base_rep_branch_forward.1}
  #allocation0 [shape = 'u32[]', space=smem, size = 0x4, offset = 0x4, fixed_abs, tag = 'smem constant byte address 0x4 - core index']
  #allocation1 [shape = 'u32[144,128]{1,0:T(1,128)}', space=vmem, size = 0x12000, scoped, tag = 'internal scratch']
  %s0 = inlined_call_operand.vmem [shape: f32[8,64], index: 0, kind: input, shape index: {}]
  %s1 = inlined_call_operand.vmem [shape: f32[8,2], index: 1, kind: input, shape index: {}]
  %s2 = inlined_call_operand.vmem [shape: f32[8,64], index: 2, kind: output, shape index: {}]
  %s3 = sld [smem:[#allocation0]]
  $region18: #{base_rep_branch_forward.1} parent=0
    _
  %s5 = ssub.s32 1, %s3
  %s6 = scalar_select 0, %s5, %s3
  // Predicated region
  $region2: #{base_rep_branch_forward.1} parent=0 // pred_check
    _
  $region3: #{base_rep_branch_forward.1} parent=0 // pred_check_branch
    %8 = sbr.rel (0) target = $region5
  $region4: #{base_rep_branch_forward.1} parent=0 // pred_region
    _
  $region5: #{base_rep_branch_forward.1} parent=0 // pred_fallthru
    _
  // Predicated region
  $region6: #{base_rep_branch_forward.1} parent=0 // pred_check
    _
  $region7: #{base_rep_branch_forward.1} parent=0 // pred_check_branch
    %10 = sbr.rel (0) target = $region9
  $region8: #{base_rep_branch_forward.1} parent=0 // pred_region
    _
  $region9: #{base_rep_branch_forward.1} parent=0 // pred_fallthru
    _
  %v11 = vld [vmem:[%s0] sm:$0xff]
  %v12 = vld [vmem:[%s1] sm:$0xff]
  %14 = vset.pattern.permute.xlu0 0
  %15 = vperm.xlu0 %14, %v12
  %v16 = vpop.permute.xlu0 %15
  %v18 = vmul.f32 %v11, %v16
  %19 = vset.pattern.permute.xlu0 1
  %20 = vperm.xlu0 %19, %v12
  %v21 = vpop.permute.xlu0 %20
  %v23 = vadd.f32 %v18, %v21
  %vm24 = vcmask 523264
  %25 = vst.msk [vmem:[%s2] sm:$0xff] %vm24, %v23
  // Predicated region
  $region10: #{base_rep_branch_forward.1} parent=0 // pred_check
    _
  $region11: #{base_rep_branch_forward.1} parent=0 // pred_check_branch
    %27 = sbr.rel (0) target = $region13
  $region12: #{base_rep_branch_forward.1} parent=0 // pred_region
    _
  $region13: #{base_rep_branch_forward.1} parent=0 // pred_fallthru
    _
  // Predicated region
  $region14: #{base_rep_branch_forward.1} parent=0 // pred_check
    _
  $region15: #{base_rep_branch_forward.1} parent=0 // pred_check_branch
    %29 = sbr.rel (0) target = $region17
  $region16: #{base_rep_branch_forward.1} parent=0 // pred_region
    _
  $region17: #{base_rep_branch_forward.1} parent=0 // pred_fallthru
    _

</llo_original>
